<compile_context>
chip_gen: v5e
topology: v5e:2x2
jax: 0.10.0
libtpu: 0.0.40
codegen_flags: <defaults>
</compile_context>

<pallas_src>
import warnings

import jax
import jax.numpy as jnp
from jax.experimental import pallas as pl
from jax.experimental.pallas import tpu as pltpu

_LANE = 128
_MAX_LANES = 2048
_MAX_TILE_ROWS = 512
_MAX_TILE_BYTES = 3 * 1024 * 1024  # 2 specs x 2 pipeline buffers = 12 MiB < 16 MiB (v5e)


# ---------------------------------------------------------------------------
# Preferred Pallas path: no-DMA token anchor (loss never streamed through VMEM)
# ---------------------------------------------------------------------------
def _token_kernel(loss_hbm_ref, tok_ref):
    # DummyCriterion does no compute: leave `loss` untouched in HBM and emit a
    # tiny token so the call has something to schedule / fuse against.
    del loss_hbm_ref
    tok_ref[...] = jnp.zeros_like(tok_ref)


def _pallas_token_anchor(loss: jax.Array) -> jax.Array:
    return pl.pallas_call(
        _token_kernel,
        out_shape=jax.ShapeDtypeStruct((8, _LANE), jnp.float32),
        in_specs=[pl.BlockSpec(memory_space=pl.ANY)],  # raw HBM ref, no auto-DMA
        compiler_params=pltpu.CompilerParams(has_side_effects=True),
    )(loss)


# ---------------------------------------------------------------------------
# Optional fusion-anchor path: tiled, aliased identity copy of `loss`.
# ---------------------------------------------------------------------------
def _identity_copy_kernel(x_ref, o_ref):
    o_ref[...] = x_ref[...]


def _tiled_identity_2d(x2d: jax.Array) -> jax.Array:
    rows, lanes = x2d.shape
    itemsize = x2d.dtype.itemsize

    if rows >= 8:
        rows_cap = max(8, (_MAX_TILE_BYTES // max(1, lanes * itemsize)) // 8 * 8)
        tb = min(_MAX_TILE_ROWS, rows_cap, (rows // 8) * 8)
        tb = max(8, (tb // 8) * 8)
    else:
        tb = rows  # full row extent (divisibility waived when equal to array dim)

    grid = (pl.cdiv(rows, tb),)  # Pallas handles the partial last block
    return pl.pallas_call(
        _identity_copy_kernel,
        out_shape=jax.ShapeDtypeStruct(x2d.shape, x2d.dtype),
        grid=grid,
        in_specs=[pl.BlockSpec((tb, lanes), lambda i: (i, 0))],
        out_specs=pl.BlockSpec((tb, lanes), lambda i: (i, 0)),
        # Output aliases input 0 -> under jit+donation this is a pure in-place
        # writeback (no fresh HBM allocation).
        input_output_aliases={0: 0},
        compiler_params=pltpu.CompilerParams(
            dimension_semantics=("parallel",),  # v7x: shard copy across 2 TCs
            vmem_limit_bytes=32 << 20,          # v5e headroom above 16 MiB default
        ),
    )(x2d)


def _as_lane_dense_2d(flat: jax.Array, n_aligned: int) -> jax.Array:
    lanes = _LANE
    # Widen lanes only while the row count stays >= 8 (keep sublanes busy).
    while (lanes * 2 <= _MAX_LANES
           and n_aligned % (lanes * 2) == 0
           and n_aligned // (lanes * 2) >= 8):
        lanes *= 2
    return flat[:n_aligned].reshape(n_aligned // lanes, lanes)


def _pallas_identity_copy(loss: jax.Array) -> jax.Array:
    orig_shape = loss.shape
    n = int(loss.size)
    flat = loss.reshape(-1)
    n_aligned = (n // _LANE) * _LANE
    if n_aligned == 0:
        # Too small for a lane-dense slab: the identity is free in pure JAX.
        return loss
    head = _tiled_identity_2d(_as_lane_dense_2d(flat, n_aligned)).reshape(-1)
    if n_aligned == n:
        return head.reshape(orig_shape)
    # Guarded ragged tail: small pure-JAX passthrough instead of one big
    # un-tiled block (avoids the VMEM blow-up path, worst on v7x's 64 MiB).
    tail = flat[n_aligned:]
    return jnp.concatenate([head, tail]).reshape(orig_shape)


# jit + donation so input_output_aliases becomes a true in-place writeback.
_pallas_identity_copy_jit = jax.jit(_pallas_identity_copy, donate_argnums=(0,))


# ---------------------------------------------------------------------------
# Public wrapper: DummyCriterion.forward(loss, labels) -> loss
# ---------------------------------------------------------------------------
def dummy_criterion(loss: jax.Array, labels: jax.Array, *,
                    use_pallas: bool = False,
                    materialize_copy: bool = False) -> jax.Array:
    """Pallas/JAX implementation of DummyCriterion.forward: returns `loss`."""
    del labels  # unused, exactly as in the reference module

    if not use_pallas:
        # Highest-value path: pure identity, no kernel, no HBM traffic.
        return loss

    if materialize_copy:
        # Streamed copy fusion anchor (tiled, aliased, jitted + donated).
        return _pallas_identity_copy_jit(loss)

    # No-DMA token anchor: kernel launch only; `loss` is returned untouched.
    _pallas_token_anchor(loss)
    return loss


if __name__ == "__main__":
    warnings.filterwarnings("ignore", message="Some donated buffers were not usable")

    key = jax.random.PRNGKey(0)
    k_loss, k_labels = jax.random.split(key)

    # Small synthetic shapes: per-example loss values [batch=8, feature=128]
    # and integer class labels [batch=8] (unused by the criterion).
    loss = jax.random.normal(k_loss, (8, 128), dtype=jnp.float32)
    labels = jax.random.randint(k_labels, (8,), 0, 10, dtype=jnp.int32)

    # 1) Preferred zero-cost identity path.
    out_fast = jax.block_until_ready(dummy_criterion(loss, labels))
    assert out_fast.shape == loss.shape and out_fast.dtype == loss.dtype
    assert bool(jnp.array_equal(out_fast, loss))

    # 2) Token-anchor path: no HBM round trip of `loss`; verify the anchor runs.
    tok = jax.block_until_ready(_pallas_token_anchor(loss))
    assert tok.shape == (8, _LANE)
    out_tok = jax.block_until_ready(dummy_criterion(loss, labels, use_pallas=True))
    assert bool(jnp.array_equal(out_tok, loss))

    # 3) Materialized-copy fusion anchor (jit + donated argument): donate a
    #    separate buffer so the original `loss` stays readable for comparison.
    loss_donate = jnp.array(loss, copy=True)
    out_copy = jax.block_until_ready(
        dummy_criterion(loss_donate, labels, use_pallas=True, materialize_copy=True))
    assert out_copy.shape == loss.shape and out_copy.dtype == loss.dtype
    assert bool(jnp.array_equal(out_copy, loss))

    # 4) Ragged small tensor (< one lane): token path and copy path both fall
    #    back to the free identity.
    loss_tiny = jax.random.normal(key, (5, 7), dtype=jnp.float32)
    out_tiny = jax.block_until_ready(
        dummy_criterion(loss_tiny, labels, use_pallas=True))
    assert bool(jnp.array_equal(out_tiny, loss_tiny))

    # 5) Ragged larger tensor: 128-aligned prefix via the tiled kernel plus a
    #    pure-JAX tail (exercised without donation so the input stays valid).
    loss_ragged = jax.random.normal(k_labels, (3, 100), dtype=jnp.float32)
    out_ragged = jax.block_until_ready(_pallas_identity_copy(loss_ragged))
    assert bool(jnp.array_equal(out_ragged, loss_ragged))

    print("KERNEL_OK")
</pallas_src>

<mosaic_0001>
module attributes {stable_mosaic.version = 11 : i64} {
  func.func @_token_kernel(%arg0: memref<8x128xf32, #tpu.memory_space<any>>, %arg1: memref<8x128xf32, #tpu.memory_space<vmem>>) attributes {dimension_semantics = [], scalar_prefetch = 0 : i64, scratch_operands = 0 : i64, tpu.core_type = #tpu.core_type<tc>} {
    %cst = arith.constant 0.000000e+00 : f32
    %0 = vector.broadcast %cst : f32 to vector<8x128xf32>
    %c0 = arith.constant 0 : index
    %c0_0 = arith.constant 0 : index
    %1 = vector.load %arg1[%c0, %c0_0] : memref<8x128xf32, #tpu.memory_space<vmem>>, vector<8x128xf32>
    tpu.vector_store %arg1[%c0, %c0_0], %0 {strides = array<i32>} : memref<8x128xf32, #tpu.memory_space<vmem>>, vector<8x128xf32>,
    return
  }
}

</mosaic_0001>

<llo_original>
// kernel: tpu_custom_call.1
$region0: #{tpu_custom_call.1}
  #allocation0 [shape = 'u32[]', space=smem, size = 0x4, offset = 0x4, fixed_abs, tag = 'smem constant byte address 0x4 - core index']
  #allocation1 [shape = 'u32[72,128]{1,0:T(1,128)}', space=vmem, size = 0x9000, scoped, tag = 'internal scratch']
  %s0 = inlined_call_operand.hbm [shape: f32[8,128], index: 0, kind: input, shape index: {}]
  %s1 = inlined_call_operand.hbm [shape: f32[8,128], index: 1, kind: output, shape index: {}]
  %s2 = sld [smem:[#allocation0]]
  $region10: #{tpu_custom_call.1} parent=0
    _
  %s4 = ssub.s32 1, %s2
  %s5 = scalar_select 0, %s4, %s2
  $region1: #{tpu_custom_call.1} parent=0
    #allocation2 [shape = 'u8[4096]{0}', space=vmem, size = 0x1000, scoped, tag = 'output window, operand 0, single buffered']
    #allocation3 [shape = 's32[1]{0}', space=sflag, size = 0x4, scoped, tag = 'scoped memory for tpu_custom_call.1']
    %6 = vsyncpa [#allocation3], 0
    %7 = vst [vmem:[#allocation2] sm:$0xff] 0.0
    // Predicated region
    $region2: #{tpu_custom_call.1} parent=1 // pred_check
      _
    $region3: #{tpu_custom_call.1} parent=1 // pred_check_branch
      %9 = sbr.rel (0) target = $region5
    $region4: #{tpu_custom_call.1} parent=1 // pred_region
      %11 = vsyncadd [#allocation3], 0
      %s13 = sshll.u32 [#allocation2], 4
      %s14 = int_to_ptr.vmem [resolvable:$true] %s13
      %s15 = sshll.u32 %s1, 4
      %s16 = int_to_ptr.hbm [resolvable:$true] %s15
      %18 = dma.vmem_to_hbm [thread:$0]  %s14, 128, %s16, [#allocation3]
    $region5: #{tpu_custom_call.1} parent=1 // pred_fallthru
      _
    // Predicated region
    $region6: #{tpu_custom_call.1} parent=1 // pred_check
      _
    $region7: #{tpu_custom_call.1} parent=1 // pred_check_branch
      %20 = sbr.rel (0) target = $region9
    $region8: #{tpu_custom_call.1} parent=1 // pred_region
      %22 = dma.done [#allocation3], 128
    $region9: #{tpu_custom_call.1} parent=1 // pred_fallthru
      _
    %23 = vsyncpa [#allocation3], 1

</llo_original>
